<compile_context>
chip_gen: v7x
topology: tpu7x:2x2x1
jax: 0.10.0
libtpu: 0.0.40
codegen_flags: <defaults>
</compile_context>

<pallas_src>
import jax
import jax.numpy as jnp
from jax.experimental import pallas as pl
from jax.experimental.pallas import tpu as pltpu

# --- module hyper-parameters (from config['model'] / config['integration']) ---
N_EXPERTS   = 4                      # config['model']['n_experts']
STATE_DIM   = 4                      # config['model']['state_dim']
HIDDEN      = 32                     # config['model']['expert_architecture']['width']
GATE_HIDDEN = 32                     # fixed in the module
INPUT_DIM   = STATE_DIM + 3          # [x, t, sin(t), cos(t)]
TFEAT_DIM   = 4                      # [t, sin(t), cos(t), 1]  (biases folded in)
HW          = N_EXPERTS * HIDDEN     # 128 fused expert-hidden lanes
L1_OUT      = 2 * HW                 # 256: expert lanes | gate lanes | const | pad
GATE_OFF    = HW                     # gate-hidden lanes start at 128
MAX_NORM    = 0.0                    # config['integration'].get('dynamics_max_norm', 0.0)
BATCH       = 8


def _round_up(n, m):
    return ((n + m - 1) // m) * m


def _batch_tiling(B):
    """Batch tile / padded batch. Big tiles amortize the ~0.35us/step cost and fill the
    MXU M dimension; for large batches keep >= 2 grid steps so the 'parallel' axis can
    shard across v7x's two TensorCores (no-op on v5e/v6e)."""
    TB = min(_round_up(B, 8), 1024)
    Bp = _round_up(B, TB)
    if Bp // TB < 2 and B >= 256:
        TB = _round_up((B + 1) // 2, 8)
        Bp = _round_up(B, TB)
    return TB, Bp


# ----------------------------- in-kernel helpers ------------------------------
def _dot(a, b):
    # cast the activation to the (possibly bf16) weight dtype; accumulate in f32
    return jnp.dot(a.astype(b.dtype), b, preferred_element_type=jnp.float32)


def _moe_dynamics(x, tfeat, w):
    """dx/dt for a [rows, 4] state block; x, tfeat f32 -> f32 [rows, 4]."""
    e1x, e1t, g2, e2, b2, e3w, e3b, emask = w
    # fused L1: expert lanes [0,128) and gate lanes [128,161) in one MXU pass
    h = jnp.maximum(_dot(x, e1x) + _dot(tfeat, e1t), 0.0)        # [rows, 256]
    h1, gh = h[:, :HW], h[:, HW:]                                 # [rows, 128] each
    # gate second layer + softmax (gate L1 bias / constant-1 lane already folded)
    logits = _dot(gh, g2)                                         # [rows, 4]
    logits = logits - jnp.max(logits, axis=-1, keepdims=True)
    ex = jnp.exp(logits)
    gate = ex * pl.reciprocal(jnp.sum(ex, axis=-1, keepdims=True), approx=False)
    # expert L2 (block-diagonal) + bias
    h2 = jnp.maximum(_dot(h1, e2) + b2.astype(jnp.float32), 0.0)  # [rows, 128]
    # broadcast gate weights to the 128 expert lanes via the precomputed mask matmul
    wlane = _dot(gate, emask)                                     # [rows, 128]
    # gated output: sum_i w_i * (h2_i @ W3_i + b3_i)
    # TODO(synk): dynamics_max_norm > 0 needs per-expert outputs before gating; the
    # config default (0.0) disables it, so this fused-gating path is exact.
    return _dot(h2 * wlane, e3w) + _dot(gate, e3b)                # [rows, 4]


def _time_features(t, rows):
    """[rows, 4] = [t, sin t, cos t, 1] from a scalar t (iota-select, no lane concat)."""
    lane = jax.lax.broadcasted_iota(jnp.int32, (rows, TFEAT_DIM), 1)
    tb = jnp.full((rows, TFEAT_DIM), t, jnp.float32)
    return jnp.where(lane == 0, tb,
           jnp.where(lane == 1, jnp.sin(tb),
           jnp.where(lane == 2, jnp.cos(tb), 1.0)))


# -------------------------------- Pallas kernels ------------------------------
def moe_forward_kernel(x_ref, tf_ref, e1x_ref, e1t_ref, g2_ref, e2_ref, b2_ref,
                       e3w_ref, e3b_ref, emask_ref, out_ref):
    w = (e1x_ref[...], e1t_ref[...], g2_ref[...], e2_ref[...], b2_ref[...],
         e3w_ref[...], e3b_ref[...], emask_ref[...])
    out = _moe_dynamics(x_ref[...].astype(jnp.float32),
                        tf_ref[...].astype(jnp.float32), w)
    # TODO(synk): output last dim is 4 (<128 lanes) -> masked partial stores; a
    # lane-dense repack only pays off at training-scale batches.
    out_ref[...] = out.astype(out_ref.dtype)


def moe_rk4_kernel(ts_ref, x0_ref, e1x_ref, e1t_ref, g2_ref, e2_ref, b2_ref,
                   e3w_ref, e3b_ref, emask_ref, traj_ref, state):
    s = pl.program_id(1)

    @pl.when(s == 0)                       # new batch tile -> load initial state
    def _():
        state[...] = x0_ref[...].astype(jnp.float32)

    w = (e1x_ref[...], e1t_ref[...], g2_ref[...], e2_ref[...], b2_ref[...],
         e3w_ref[...], e3b_ref[...], emask_ref[...])
    rows = state.shape[0]

    t0 = ts_ref[s]
    dt = ts_ref[s + 1] - t0
    half = 0.5 * dt

    def f(t, xv):
        return _moe_dynamics(xv, _time_features(t, rows), w)

    x = state[...]
    k1 = f(t0, x)
    k2 = f(t0 + half, x + half * k1)
    k3 = f(t0 + half, x + half * k2)
    k4 = f(t0 + dt, x + dt * k3)
    x_new = x + (dt * (1.0 / 6.0)) * (k1 + 2.0 * (k2 + k3) + k4)

    state[...] = x_new
    traj_ref[...] = x_new[None, :, :].astype(traj_ref.dtype)


# --------------------------------- wrappers -----------------------------------
def _weight_specs(fused):
    # whole tile-aligned weight arrays, constant index_map -> stay VMEM-resident
    return [pl.BlockSpec(w.shape, lambda *_: (0, 0)) for w in fused]


def _cost(rows, n_evals, fused, io_bytes):
    per_row = 2 * (STATE_DIM * L1_OUT + TFEAT_DIM * L1_OUT + HW * N_EXPERTS
                   + HW * HW + N_EXPERTS * HW + HW * STATE_DIM
                   + N_EXPERTS * STATE_DIM)
    wbytes = sum(int(w.size) * w.dtype.itemsize for w in fused)
    return pl.CostEstimate(flops=int(per_row * rows * n_evals),
                           transcendentals=int(7 * rows * n_evals),
                           bytes_accessed=int(wbytes + io_bytes))


def traditional_moe_forward(t, x, fused):
    """One dynamics evaluation: mirrors TraditionalMoE.forward(t, x)."""
    if MAX_NORM > 0:
        raise NotImplementedError("dynamics_max_norm > 0 unsupported by fused gating")
    B = x.shape[0]
    t = jnp.asarray(t, jnp.float32)
    if t.ndim == 0:
        t = jnp.broadcast_to(t[None], (B,))     # t.unsqueeze(0).expand(B)
    if t.ndim == 1:
        t = t[:, None]                          # t.unsqueeze(-1)
    tfeat = jnp.concatenate([t, jnp.sin(t), jnp.cos(t),
                             jnp.ones((B, 1), jnp.float32)], axis=-1)    # [B, 4]
    x32 = x.astype(jnp.float32)

    TB, Bp = _batch_tiling(B)
    if Bp != B:  # padded rows give garbage; correctness relies on the final [:B] slice
        x32 = jnp.pad(x32, ((0, Bp - B), (0, 0)))
        tfeat = jnp.pad(tfeat, ((0, Bp - B), (0, 0)))

    out = pl.pallas_call(
        moe_forward_kernel,
        out_shape=jax.ShapeDtypeStruct((Bp, STATE_DIM), x.dtype),
        grid=(Bp // TB,),
        in_specs=[pl.BlockSpec((TB, STATE_DIM), lambda i: (i, 0)),
                  pl.BlockSpec((TB, TFEAT_DIM), lambda i: (i, 0))]
                 + _weight_specs(fused),
        out_specs=pl.BlockSpec((TB, STATE_DIM), lambda i: (i, 0)),
        compiler_params=pltpu.CompilerParams(dimension_semantics=("parallel",)),
        cost_estimate=_cost(Bp, 1, fused,
                            Bp * (STATE_DIM + TFEAT_DIM + STATE_DIM) * 4),
    )(x32, tfeat, *fused)
    return out[:B]


def traditional_moe_integrate_rk4(x0, t_span, fused):
    """Fixed-step classic RK4 over t_span with the whole solve in ONE pallas_call:
    the time loop is an 'arbitrary' grid axis, the state is carried in VMEM scratch,
    and the fused weights are DMA'd once per solve (not once per evaluation).
    Returns the trajectory [len(t_span), B, STATE_DIM] (trajectory[0] == x0)."""
    if MAX_NORM > 0:
        raise NotImplementedError("dynamics_max_norm > 0 unsupported by fused gating")
    B, D = x0.shape
    S = int(t_span.shape[0])
    n_steps = S - 1
    ts = jnp.asarray(t_span, jnp.float32)

    TB, Bp = _batch_tiling(B)
    x0p = x0.astype(jnp.float32)
    if Bp != B:
        x0p = jnp.pad(x0p, ((0, Bp - B), (0, 0)))
    n_bt = Bp // TB

    traj = pl.pallas_call(
        moe_rk4_kernel,
        out_shape=jax.ShapeDtypeStruct((n_steps, Bp, D), x0.dtype),
        grid=(n_bt, n_steps),
        in_specs=[pl.BlockSpec(memory_space=pltpu.MemorySpace.SMEM),       # t_span
                  pl.BlockSpec((TB, D), lambda b, s: (b, 0))]              # x0
                 + _weight_specs(fused),
        out_specs=pl.BlockSpec((1, TB, D), lambda b, s: (s, b, 0)),
        scratch_shapes=[pltpu.VMEM((TB, D), jnp.float32)],                 # carried state
        compiler_params=pltpu.CompilerParams(
            dimension_semantics=("parallel", "arbitrary")),
        cost_estimate=_cost(Bp, 4 * n_steps, fused,
                            (Bp * D + n_steps * Bp * D + S) * 4),
    )(ts, x0p, *fused)
    # TODO(synk): adaptive-step methods (dopri5/rtol/atol) and the adjoint path of
    # integrate() are not expressible as a static Pallas grid; only fixed-step RK4 here.
    return jnp.concatenate([x0[None].astype(x0.dtype), traj[:, :B, :]], axis=0)


# ----------------------- deterministic parameter init -------------------------
def _xavier_normal_t(key, fan_out, fan_in, gain):
    """torch.nn.init.xavier_normal_ on an [out, in] weight, returned as [in, out]."""
    std = gain * (2.0 / (fan_in + fan_out)) ** 0.5
    return (std * jax.random.normal(key, (fan_out, fan_in), jnp.float32)).T


def init_params(key):
    ks = jax.random.split(key, 2 + 3 * N_EXPERTS)
    gw1 = _xavier_normal_t(ks[0], GATE_HIDDEN, INPUT_DIM, 1.0)        # [7, 32]
    gb1 = jnp.zeros((GATE_HIDDEN,), jnp.float32)
    gw2 = _xavier_normal_t(ks[1], N_EXPERTS, GATE_HIDDEN, 1.0)        # [32, 4]
    gb2 = jnp.zeros((N_EXPERTS,), jnp.float32)
    ew1, ew2, ew3 = [], [], []
    for i in range(N_EXPERTS):
        k1, k2, k3 = ks[2 + 3 * i], ks[3 + 3 * i], ks[4 + 3 * i]
        ew1.append(_xavier_normal_t(k1, HIDDEN, INPUT_DIM, 0.5))      # [7, 32]
        ew2.append(_xavier_normal_t(k2, HIDDEN, HIDDEN, 0.5))         # [32, 32]
        ew3.append(_xavier_normal_t(k3, STATE_DIM, HIDDEN, 0.5))      # [32, 4]
    ew1, ew2, ew3 = jnp.stack(ew1), jnp.stack(ew2), jnp.stack(ew3)
    eb1 = jnp.zeros((N_EXPERTS, HIDDEN), jnp.float32)
    eb2 = jnp.zeros((N_EXPERTS, HIDDEN), jnp.float32)
    eb3 = jnp.zeros((N_EXPERTS, STATE_DIM), jnp.float32)
    return (gw1, gb1, gw2, gb2, ew1, eb1, ew2, eb2, ew3, eb3)


def fuse_params(params, dtype=jnp.float32):
    """Pack parameters into 8 tile-aligned buffers the kernels consume.
    dtype=jnp.bfloat16 halves the resident-weight DMA on v6e/v7x (accumulation stays
    f32 in-kernel); keep float32 on v5e / for bit-tight numerics."""
    gw1, gb1, gw2, gb2, ew1, eb1, ew2, eb2, ew3, eb3 = params
    e1x = jnp.zeros((STATE_DIM, L1_OUT), jnp.float32)   # rows: state dims
    e1t = jnp.zeros((TFEAT_DIM, L1_OUT), jnp.float32)   # rows: [t, sin t, cos t, 1]
    e2  = jnp.zeros((HW, HW), jnp.float32)              # block-diagonal expert L2
    b2  = jnp.zeros((1, HW), jnp.float32)
    e3w = jnp.zeros((HW, STATE_DIM), jnp.float32)       # stacked expert L3
    e3b = jnp.zeros((N_EXPERTS, STATE_DIM), jnp.float32)
    for i in range(N_EXPERTS):
        lo, hi = i * HIDDEN, (i + 1) * HIDDEN
        e1x = e1x.at[:, lo:hi].set(ew1[i][:STATE_DIM, :])
        e1t = e1t.at[0:3, lo:hi].set(ew1[i][STATE_DIM:, :])
        e1t = e1t.at[3, lo:hi].set(eb1[i])
        e2  = e2.at[lo:hi, lo:hi].set(ew2[i])
        b2  = b2.at[0, lo:hi].set(eb2[i])
        e3w = e3w.at[lo:hi, :].set(ew3[i])
        e3b = e3b.at[i, :].set(eb3[i])
    # gate first layer in lanes [128,160); constant-1 gate feature at lane 160 so the
    # gate L2 bias folds into row GATE_HIDDEN of g2
    e1x = e1x.at[:, GATE_OFF:GATE_OFF + GATE_HIDDEN].set(gw1[:STATE_DIM, :])
    e1t = e1t.at[0:3, GATE_OFF:GATE_OFF + GATE_HIDDEN].set(gw1[STATE_DIM:, :])
    e1t = e1t.at[3, GATE_OFF:GATE_OFF + GATE_HIDDEN].set(gb1)
    e1t = e1t.at[3, GATE_OFF + GATE_HIDDEN].set(1.0)
    g2 = jnp.zeros((HW, N_EXPERTS), jnp.float32)
    g2 = g2.at[:GATE_HIDDEN, :].set(gw2)
    g2 = g2.at[GATE_HIDDEN, :].set(gb2)
    # expert-lane one-hot mask: gate weights -> 128 expert lanes via one tiny matmul
    emask = (jnp.arange(HW)[None, :] // HIDDEN
             == jnp.arange(N_EXPERTS)[:, None]).astype(jnp.float32)
    return tuple(w.astype(dtype) for w in (e1x, e1t, g2, e2, b2, e3w, e3b, emask))


# ------------------------------ pure-JAX references ---------------------------
def reference_forward(t, x, params):
    gw1, gb1, gw2, gb2, ew1, eb1, ew2, eb2, ew3, eb3 = params
    B = x.shape[0]
    t = jnp.asarray(t, x.dtype)
    if t.ndim == 0:
        t = jnp.broadcast_to(t[None], (B,))
    if t.ndim == 1:
        t = t[:, None]
    inp = jnp.concatenate([x, t, jnp.sin(t), jnp.cos(t)], axis=-1)
    g = jax.nn.relu(inp @ gw1 + gb1)
    w = jax.nn.softmax(g @ gw2 + gb2, axis=-1)
    out = jnp.zeros_like(x)
    for i in range(N_EXPERTS):
        h1 = jax.nn.relu(inp @ ew1[i] + eb1[i])
        h2 = jax.nn.relu(h1 @ ew2[i] + eb2[i])
        out = out + w[:, i:i + 1] * (h2 @ ew3[i] + eb3[i])
    return out


def reference_rk4(x0, t_span, params):
    xs = [x0]
    x = x0
    for i in range(t_span.shape[0] - 1):
        t0 = t_span[i]
        dt = t_span[i + 1] - t0
        k1 = reference_forward(t0, x, params)
        k2 = reference_forward(t0 + dt / 2, x + dt / 2 * k1, params)
        k3 = reference_forward(t0 + dt / 2, x + dt / 2 * k2, params)
        k4 = reference_forward(t0 + dt, x + dt * k3, params)
        x = x + dt / 6 * (k1 + 2 * k2 + 2 * k3 + k4)
        xs.append(x)
    return jnp.stack(xs)


if __name__ == "__main__":
    key = jax.random.PRNGKey(0)
    kx, kp = jax.random.split(key)
    x = jax.random.normal(kx, (BATCH, STATE_DIM), jnp.float32)
    t = jnp.float32(0.3)                       # scalar ODE time, expanded per batch row
    params = init_params(kp)
    fused = fuse_params(params)                # f32; pass dtype=jnp.bfloat16 on v6e/v7x

    # single dynamics evaluation (== module forward)
    out = traditional_moe_forward(t, x, fused)
    jax.block_until_ready(out)
    ref = reference_forward(t, x, params)
    assert out.shape == x.shape
    # tolerance covers TPU default matmul-precision differences between decompositions
    assert jnp.allclose(out, ref, atol=1e-3, rtol=1e-3), "forward mismatch vs reference"

    # whole fixed-step RK4 solve fused into one pallas_call (weights DMA'd once)
    t_span = jnp.linspace(0.0, 0.8, 9).astype(jnp.float32)
    traj = traditional_moe_integrate_rk4(x, t_span, fused)
    jax.block_until_ready(traj)
    traj_ref = reference_rk4(x, t_span, params)
    assert traj.shape == (int(t_span.shape[0]), BATCH, STATE_DIM)
    assert jnp.allclose(traj, traj_ref, atol=2e-3, rtol=2e-3), "rk4 trajectory mismatch"

    print("KERNEL_OK")
</pallas_src>

<mosaic_0001>
module attributes {stable_mosaic.version = 11 : i64} {
  func.func @moe_forward_kernel(%arg0: i32, %arg1: memref<8x4xf32, #tpu.memory_space<vmem>>, %arg2: memref<8x4xf32, #tpu.memory_space<vmem>>, %arg3: memref<4x256xf32, #tpu.memory_space<vmem>>, %arg4: memref<4x256xf32, #tpu.memory_space<vmem>>, %arg5: memref<128x4xf32, #tpu.memory_space<vmem>>, %arg6: memref<128x128xf32, #tpu.memory_space<vmem>>, %arg7: memref<1x128xf32, #tpu.memory_space<vmem>>, %arg8: memref<128x4xf32, #tpu.memory_space<vmem>>, %arg9: memref<4x4xf32, #tpu.memory_space<vmem>>, %arg10: memref<4x128xf32, #tpu.memory_space<vmem>>, %arg11: memref<8x4xf32, #tpu.memory_space<vmem>>) attributes {dimension_semantics = [#tpu.dimension_semantics<parallel>], iteration_bounds = array<i64: 1>, scalar_prefetch = 0 : i64, scratch_operands = 0 : i64, tpu.core_type = #tpu.core_type<tc>, window_params = [{transform_indices = @transform_0, window_bounds = array<i64: 8, 4>}, {transform_indices = @transform_1, window_bounds = array<i64: 8, 4>}, {pipeline_mode = #tpu.pipeline_mode<synchronous>, transform_indices = @transform_2, window_bounds = array<i64: 4, 256>}, {pipeline_mode = #tpu.pipeline_mode<synchronous>, transform_indices = @transform_3, window_bounds = array<i64: 4, 256>}, {pipeline_mode = #tpu.pipeline_mode<synchronous>, transform_indices = @transform_4, window_bounds = array<i64: 128, 4>}, {pipeline_mode = #tpu.pipeline_mode<synchronous>, transform_indices = @transform_5, window_bounds = array<i64: 128, 128>}, {pipeline_mode = #tpu.pipeline_mode<synchronous>, transform_indices = @transform_6, window_bounds = array<i64: 1, 128>}, {pipeline_mode = #tpu.pipeline_mode<synchronous>, transform_indices = @transform_7, window_bounds = array<i64: 128, 4>}, {pipeline_mode = #tpu.pipeline_mode<synchronous>, transform_indices = @transform_8, window_bounds = array<i64: 4, 4>}, {pipeline_mode = #tpu.pipeline_mode<synchronous>, transform_indices = @transform_9, window_bounds = array<i64: 4, 128>}, {transform_indices = @transform_10, window_bounds = array<i64: 8, 4>}]} {
    %c0 = arith.constant 0 : index
    %c0_0 = arith.constant 0 : index
    %0 = vector.load %arg3[%c0, %c0_0] : memref<4x256xf32, #tpu.memory_space<vmem>>, vector<4x256xf32>
    %c0_1 = arith.constant 0 : index
    %c0_2 = arith.constant 0 : index
    %1 = vector.load %arg4[%c0_1, %c0_2] : memref<4x256xf32, #tpu.memory_space<vmem>>, vector<4x256xf32>
    %c0_3 = arith.constant 0 : index
    %c0_4 = arith.constant 0 : index
    %2 = vector.load %arg5[%c0_3, %c0_4] : memref<128x4xf32, #tpu.memory_space<vmem>>, vector<128x4xf32>
    %c0_5 = arith.constant 0 : index
    %c0_6 = arith.constant 0 : index
    %3 = vector.load %arg6[%c0_5, %c0_6] : memref<128x128xf32, #tpu.memory_space<vmem>>, vector<128x128xf32>
    %c0_7 = arith.constant 0 : index
    %c0_8 = arith.constant 0 : index
    %4 = vector.load %arg7[%c0_7, %c0_8] : memref<1x128xf32, #tpu.memory_space<vmem>>, vector<1x128xf32>
    %c0_9 = arith.constant 0 : index
    %c0_10 = arith.constant 0 : index
    %5 = vector.load %arg8[%c0_9, %c0_10] : memref<128x4xf32, #tpu.memory_space<vmem>>, vector<128x4xf32>
    %c0_11 = arith.constant 0 : index
    %c0_12 = arith.constant 0 : index
    %6 = vector.load %arg9[%c0_11, %c0_12] : memref<4x4xf32, #tpu.memory_space<vmem>>, vector<4x4xf32>
    %c0_13 = arith.constant 0 : index
    %c0_14 = arith.constant 0 : index
    %7 = vector.load %arg10[%c0_13, %c0_14] : memref<4x128xf32, #tpu.memory_space<vmem>>, vector<4x128xf32>
    %c0_15 = arith.constant 0 : index
    %c0_16 = arith.constant 0 : index
    %8 = vector.load %arg1[%c0_15, %c0_16] : memref<8x4xf32, #tpu.memory_space<vmem>>, vector<8x4xf32>
    %c0_17 = arith.constant 0 : index
    %c0_18 = arith.constant 0 : index
    %9 = vector.load %arg2[%c0_17, %c0_18] : memref<8x4xf32, #tpu.memory_space<vmem>>, vector<8x4xf32>
    %cst = arith.constant dense<0.000000e+00> : vector<8x256xf32>
    %10 = tpu.matmul %8, %0, %cst {dimension_numbers = #tpu.dot_dimension_numbers<[1], [0], [0], [1], [0, 0, 1, 1], [], []>} : vector<8x4xf32>, vector<4x256xf32>, vector<8x256xf32> -> vector<8x256xf32>
    %cst_19 = arith.constant dense<0.000000e+00> : vector<8x256xf32>
    %11 = tpu.matmul %9, %1, %cst_19 {dimension_numbers = #tpu.dot_dimension_numbers<[1], [0], [0], [1], [0, 0, 1, 1], [], []>} : vector<8x4xf32>, vector<4x256xf32>, vector<8x256xf32> -> vector<8x256xf32>
    %12 = arith.addf %10, %11 : vector<8x256xf32>
    %cst_20 = arith.constant 0.000000e+00 : f32
    %13 = vector.broadcast %cst_20 : f32 to vector<8x256xf32>
    %14 = arith.maximumf %12, %13 : vector<8x256xf32>
    %15 = vector.extract_strided_slice %14 {offsets = [0, 0], sizes = [8, 128], strides = [1, 1]} : vector<8x256xf32> to vector<8x128xf32>
    %16 = vector.extract_strided_slice %14 {offsets = [0, 128], sizes = [8, 128], strides = [1, 1]} : vector<8x256xf32> to vector<8x128xf32>
    %cst_21 = arith.constant dense<0.000000e+00> : vector<8x4xf32>
    %17 = tpu.matmul %16, %2, %cst_21 {dimension_numbers = #tpu.dot_dimension_numbers<[1], [0], [0], [1], [0, 0, 1, 1], [], []>} : vector<8x128xf32>, vector<128x4xf32>, vector<8x4xf32> -> vector<8x4xf32>
    %cst_22 = arith.constant dense<0xFF800000> : vector<8xf32>
    %18 = vector.multi_reduction <maximumf>, %17, %cst_22 [1] : vector<8x4xf32> to vector<8xf32>
    %19 = vector.shape_cast %18 : vector<8xf32> to vector<8x1xf32>
    %20 = vector.broadcast %19 : vector<8x1xf32> to vector<8x4xf32>
    %21 = arith.subf %17, %20 : vector<8x4xf32>
    %22 = math.exp %21 : vector<8x4xf32>
    %cst_23 = arith.constant dense<0.000000e+00> : vector<8xf32>
    %23 = vector.multi_reduction <add>, %22, %cst_23 [1] : vector<8x4xf32> to vector<8xf32>
    %24 = vector.shape_cast %23 : vector<8xf32> to vector<8x1xf32>
    %25 = tpu.reciprocal %24 : vector<8x1xf32> -> vector<8x1xf32>
    %26 = vector.broadcast %25 : vector<8x1xf32> to vector<8x4xf32>
    %27 = arith.mulf %22, %26 : vector<8x4xf32>
    %cst_24 = arith.constant dense<0.000000e+00> : vector<8x128xf32>
    %28 = tpu.matmul %15, %3, %cst_24 {dimension_numbers = #tpu.dot_dimension_numbers<[1], [0], [0], [1], [0, 0, 1, 1], [], []>} : vector<8x128xf32>, vector<128x128xf32>, vector<8x128xf32> -> vector<8x128xf32>
    %29 = vector.broadcast %4 : vector<1x128xf32> to vector<8x128xf32>
    %30 = arith.addf %28, %29 : vector<8x128xf32>
    %cst_25 = arith.constant 0.000000e+00 : f32
    %31 = vector.broadcast %cst_25 : f32 to vector<8x128xf32>
    %32 = arith.maximumf %30, %31 : vector<8x128xf32>
    %cst_26 = arith.constant dense<0.000000e+00> : vector<8x128xf32>
    %33 = tpu.matmul %27, %7, %cst_26 {dimension_numbers = #tpu.dot_dimension_numbers<[1], [0], [0], [1], [0, 0, 1, 1], [], []>} : vector<8x4xf32>, vector<4x128xf32>, vector<8x128xf32> -> vector<8x128xf32>
    %34 = arith.mulf %32, %33 : vector<8x128xf32>
    %cst_27 = arith.constant dense<0.000000e+00> : vector<8x4xf32>
    %35 = tpu.matmul %34, %5, %cst_27 {dimension_numbers = #tpu.dot_dimension_numbers<[1], [0], [0], [1], [0, 0, 1, 1], [], []>} : vector<8x128xf32>, vector<128x4xf32>, vector<8x4xf32> -> vector<8x4xf32>
    %cst_28 = arith.constant dense<0.000000e+00> : vector<8x4xf32>
    %36 = tpu.matmul %27, %6, %cst_28 {dimension_numbers = #tpu.dot_dimension_numbers<[1], [0], [0], [1], [0, 0, 1, 1], [], []>} : vector<8x4xf32>, vector<4x4xf32>, vector<8x4xf32> -> vector<8x4xf32>
    %37 = arith.addf %35, %36 : vector<8x4xf32>
    %c0_29 = arith.constant 0 : index
    %c0_30 = arith.constant 0 : index
    %38 = vector.load %arg11[%c0_29, %c0_30] : memref<8x4xf32, #tpu.memory_space<vmem>>, vector<8x4xf32>
    tpu.vector_store %arg11[%c0_29, %c0_30], %37 {strides = array<i32>} : memref<8x4xf32, #tpu.memory_space<vmem>>, vector<8x4xf32>,
    return
  }
  func.func @transform_0(%arg0: i32) -> (i32, i32) {
    %c0_i32 = arith.constant 0 : i32
    %c0_i32_0 = arith.constant 0 : i32
    return %arg0, %c0_i32 : i32, i32
  }
  func.func @transform_1(%arg0: i32) -> (i32, i32) {
    %c0_i32 = arith.constant 0 : i32
    %c0_i32_0 = arith.constant 0 : i32
    return %arg0, %c0_i32 : i32, i32
  }
  func.func @transform_2(%arg0: i32) -> (i32, i32) {
    %c0_i32 = arith.constant 0 : i32
    %c0_i32_0 = arith.constant 0 : i32
    %c0_i32_1 = arith.constant 0 : i32
    return %c0_i32, %c0_i32_0 : i32, i32
  }
  func.func @transform_3(%arg0: i32) -> (i32, i32) {
    %c0_i32 = arith.constant 0 : i32
    %c0_i32_0 = arith.constant 0 : i32
    %c0_i32_1 = arith.constant 0 : i32
    return %c0_i32, %c0_i32_0 : i32, i32
  }
  func.func @transform_4(%arg0: i32) -> (i32, i32) {
    %c0_i32 = arith.constant 0 : i32
    %c0_i32_0 = arith.constant 0 : i32
    %c0_i32_1 = arith.constant 0 : i32
    return %c0_i32, %c0_i32_0 : i32, i32
  }
  func.func @transform_5(%arg0: i32) -> (i32, i32) {
    %c0_i32 = arith.constant 0 : i32
    %c0_i32_0 = arith.constant 0 : i32
    %c0_i32_1 = arith.constant 0 : i32
    return %c0_i32, %c0_i32_0 : i32, i32
  }
  func.func @transform_6(%arg0: i32) -> (i32, i32) {
    %c0_i32 = arith.constant 0 : i32
    %c0_i32_0 = arith.constant 0 : i32
    %c0_i32_1 = arith.constant 0 : i32
    return %c0_i32, %c0_i32_0 : i32, i32
  }
  func.func @transform_7(%arg0: i32) -> (i32, i32) {
    %c0_i32 = arith.constant 0 : i32
    %c0_i32_0 = arith.constant 0 : i32
    %c0_i32_1 = arith.constant 0 : i32
    return %c0_i32, %c0_i32_0 : i32, i32
  }
  func.func @transform_8(%arg0: i32) -> (i32, i32) {
    %c0_i32 = arith.constant 0 : i32
    %c0_i32_0 = arith.constant 0 : i32
    %c0_i32_1 = arith.constant 0 : i32
    return %c0_i32, %c0_i32_0 : i32, i32
  }
  func.func @transform_9(%arg0: i32) -> (i32, i32) {
    %c0_i32 = arith.constant 0 : i32
    %c0_i32_0 = arith.constant 0 : i32
    %c0_i32_1 = arith.constant 0 : i32
    return %c0_i32, %c0_i32_0 : i32, i32
  }
  func.func @transform_10(%arg0: i32) -> (i32, i32) {
    %c0_i32 = arith.constant 0 : i32
    %c0_i32_0 = arith.constant 0 : i32
    return %arg0, %c0_i32 : i32, i32
  }
}

</mosaic_0001>

<llo_original>
// kernel: tpu_custom_call.1
$region0: #{tpu_custom_call.1}
  #allocation0 [shape = 'u32[]', space=smem, size = 0x4, offset = 0x4, fixed_abs, tag = 'smem constant byte address 0x4 - core index']
  #allocation1 [shape = 'u32[144,128]{1,0:T(1,128)}', space=vmem, size = 0x12000, scoped, tag = 'internal scratch']
  %s0 = inlined_call_operand.vmem [shape: f32[8,4], index: 0, kind: input, shape index: {}]
  %s1 = inlined_call_operand.vmem [shape: f32[8,4], index: 1, kind: input, shape index: {}]
  %s2 = inlined_call_operand.vmem [shape: f32[4,256], index: 2, kind: input, shape index: {}]
  %s3 = inlined_call_operand.vmem [shape: f32[4,256], index: 3, kind: input, shape index: {}]
  %s4 = inlined_call_operand.vmem [shape: f32[128,4], index: 4, kind: input, shape index: {}]
  %s5 = inlined_call_operand.vmem [shape: f32[128,128], index: 5, kind: input, shape index: {}]
  %s6 = inlined_call_operand.vmem [shape: f32[1,128], index: 6, kind: input, shape index: {}]
  %s7 = inlined_call_operand.vmem [shape: f32[128,4], index: 7, kind: input, shape index: {}]
  %s8 = inlined_call_operand.vmem [shape: f32[4,4], index: 8, kind: input, shape index: {}]
  %s9 = inlined_call_operand.vmem [shape: f32[4,128], index: 9, kind: input, shape index: {}]
  %s10 = inlined_call_operand.vmem [shape: f32[8,4], index: 10, kind: output, shape index: {}]
  %s11 = sld [smem:[#allocation0]]
  $region50: #{tpu_custom_call.1} parent=0
    _
  %s13 = ssub.s32 1, %s11
  %s14 = scalar_select 0, %s13, %s11
  // Predicated region
  $region2: #{tpu_custom_call.1} parent=0 // pred_check
    _
  $region3: #{tpu_custom_call.1} parent=0 // pred_check_branch
    %16 = sbr.rel (0) target = $region5
  $region4: #{tpu_custom_call.1} parent=0 // pred_region
    _
  $region5: #{tpu_custom_call.1} parent=0 // pred_fallthru
    _
  // Predicated region
  $region6: #{tpu_custom_call.1} parent=0 // pred_check
    _
  $region7: #{tpu_custom_call.1} parent=0 // pred_check_branch
    %18 = sbr.rel (0) target = $region9
  $region8: #{tpu_custom_call.1} parent=0 // pred_region
    _
  $region9: #{tpu_custom_call.1} parent=0 // pred_fallthru
    _
  // Predicated region
  $region10: #{tpu_custom_call.1} parent=0 // pred_check
    _
  $region11: #{tpu_custom_call.1} parent=0 // pred_check_branch
    %20 = sbr.rel (0) target = $region13
  $region12: #{tpu_custom_call.1} parent=0 // pred_region
    _
  $region13: #{tpu_custom_call.1} parent=0 // pred_fallthru
    _
  // Predicated region
  $region14: #{tpu_custom_call.1} parent=0 // pred_check
    _
  $region15: #{tpu_custom_call.1} parent=0 // pred_check_branch
    %22 = sbr.rel (0) target = $region17
  $region16: #{tpu_custom_call.1} parent=0 // pred_region
    _
  $region17: #{tpu_custom_call.1} parent=0 // pred_fallthru
    _
  // Predicated region
  $region18: #{tpu_custom_call.1} parent=0 // pred_check
    _
  $region19: #{tpu_custom_call.1} parent=0 // pred_check_branch
    %24 = sbr.rel (0) target = $region21
  $region20: #{tpu_custom_call.1} parent=0 // pred_region
    _
  $region21: #{tpu_custom_call.1} parent=0 // pred_fallthru
    _
  // Predicated region
  $region22: #{tpu_custom_call.1} parent=0 // pred_check
    _
  $region23: #{tpu_custom_call.1} parent=0 // pred_check_branch
    %26 = sbr.rel (0) target = $region25
  $region24: #{tpu_custom_call.1} parent=0 // pred_region
    _
  $region25: #{tpu_custom_call.1} parent=0 // pred_fallthru
    _
  // Predicated region
  $region26: #{tpu_custom_call.1} parent=0 // pred_check
    _
  $region27: #{tpu_custom_call.1} parent=0 // pred_check_branch
    %28 = sbr.rel (0) target = $region29
  $region28: #{tpu_custom_call.1} parent=0 // pred_region
    _
  $region29: #{tpu_custom_call.1} parent=0 // pred_fallthru
    _
  // Predicated region
  $region30: #{tpu_custom_call.1} parent=0 // pred_check
    _
  $region31: #{tpu_custom_call.1} parent=0 // pred_check_branch
    %30 = sbr.rel (0) target = $region33
  $region32: #{tpu_custom_call.1} parent=0 // pred_region
    _
  $region33: #{tpu_custom_call.1} parent=0 // pred_fallthru
    _
  // Predicated region
  $region34: #{tpu_custom_call.1} parent=0 // pred_check
    _
  $region35: #{tpu_custom_call.1} parent=0 // pred_check_branch
    %32 = sbr.rel (0) target = $region37
  $region36: #{tpu_custom_call.1} parent=0 // pred_region
    _
  $region37: #{tpu_custom_call.1} parent=0 // pred_fallthru
    _
  // Predicated region
  $region38: #{tpu_custom_call.1} parent=0 // pred_check
    _
  $region39: #{tpu_custom_call.1} parent=0 // pred_check_branch
    %34 = sbr.rel (0) target = $region41
  $region40: #{tpu_custom_call.1} parent=0 // pred_region
    _
  $region41: #{tpu_custom_call.1} parent=0 // pred_fallthru
    _
  %v35 = vld [vmem:[%s2] sm:$0xff]
  %v36 = vld [vmem:[%s3] sm:$0xff]
  %v37 = vld [vmem:[%s4] sm:$0xff]
  %v38 = vld [vmem:[%s4 + $0x8] sm:$0xff]
  %v39 = vld [vmem:[%s4 + $0x10] sm:$0xff]
  %v40 = vld [vmem:[%s4 + $0x18] sm:$0xff]
  %v41 = vld [vmem:[%s4 + $0x20] sm:$0xff]
  %v42 = vld [vmem:[%s4 + $0x28] sm:$0xff]
  %v43 = vld [vmem:[%s4 + $0x30] sm:$0xff]
  %v44 = vld [vmem:[%s4 + $0x38] sm:$0xff]
  %v45 = vld [vmem:[%s4 + $0x40] sm:$0xff]
  %v46 = vld [vmem:[%s4 + $0x48] sm:$0xff]
  %v47 = vld [vmem:[%s4 + $0x50] sm:$0xff]
  %v48 = vld [vmem:[%s4 + $0x58] sm:$0xff]
  %v49 = vld [vmem:[%s4 + $0x60] sm:$0xff]
  %v50 = vld [vmem:[%s4 + $0x68] sm:$0xff]
  %v51 = vld [vmem:[%s4 + $0x70] sm:$0xff]
  %v52 = vld [vmem:[%s4 + $0x78] sm:$0xff]
  %v53 = vld [vmem:[%s5] sm:$0xff]
  %v54 = vld [vmem:[%s5 + $0x8] sm:$0xff]
  %v55 = vld [vmem:[%s5 + $0x10] sm:$0xff]
  %v56 = vld [vmem:[%s5 + $0x18] sm:$0xff]
  %v57 = vld [vmem:[%s5 + $0x20] sm:$0xff]
  %v58 = vld [vmem:[%s5 + $0x28] sm:$0xff]
  %v59 = vld [vmem:[%s5 + $0x30] sm:$0xff]
  %v60 = vld [vmem:[%s5 + $0x38] sm:$0xff]
  %v61 = vld [vmem:[%s5 + $0x40] sm:$0xff]
  %v62 = vld [vmem:[%s5 + $0x48] sm:$0xff]
  %v63 = vld [vmem:[%s5 + $0x50] sm:$0xff]
  %v64 = vld [vmem:[%s5 + $0x58] sm:$0xff]
  %v65 = vld [vmem:[%s5 + $0x60] sm:$0xff]
  %v66 = vld [vmem:[%s5 + $0x68] sm:$0xff]
  %v67 = vld [vmem:[%s5 + $0x70] sm:$0xff]
  %v68 = vld [vmem:[%s5 + $0x78] sm:$0xff]
  %v69 = vld [vmem:[%s6] sm:$0x1]
  %v70 = vld [vmem:[%s7] sm:$0xff]
  %v71 = vld [vmem:[%s7 + $0x8] sm:$0xff]
  %v72 = vld [vmem:[%s7 + $0x10] sm:$0xff]
  %v73 = vld [vmem:[%s7 + $0x18] sm:$0xff]
  %v74 = vld [vmem:[%s7 + $0x20] sm:$0xff]
  %v75 = vld [vmem:[%s7 + $0x28] sm:$0xff]
  %v76 = vld [vmem:[%s7 + $0x30] sm:$0xff]
  %v77 = vld [vmem:[%s7 + $0x38] sm:$0xff]
  %v78 = vld [vmem:[%s7 + $0x40] sm:$0xff]
  %v79 = vld [vmem:[%s7 + $0x48] sm:$0xff]
  %v80 = vld [vmem:[%s7 + $0x50] sm:$0xff]
  %v81 = vld [vmem:[%s7 + $0x58] sm:$0xff]
  %v82 = vld [vmem:[%s7 + $0x60] sm:$0xff]
  %v83 = vld [vmem:[%s7 + $0x68] sm:$0xff]
  %v84 = vld [vmem:[%s7 + $0x70] sm:$0xff]
  %v85 = vld [vmem:[%s7 + $0x78] sm:$0xff]
  %v86 = vld [vmem:[%s8] sm:$0xf]
  %v87 = vld [vmem:[%s9] sm:$0xf]
  %v88 = vld [vmem:[%s0] sm:$0xff]
  %v89 = vld [vmem:[%s1] sm:$0xff]
  %v91 = vcombine.high %v36, %v36
  %vm92 = vcmask 31744
  %v94 = vsel %vm92, %v89, 0
  %vm96 = vcmask 1043456
  %v97 = vsel %vm96, %v36, 0
  %v99 = vsel %vm96, %v91, 0
  %101 = vmatprep.subr.mxu0 %v99
  %102 = vmatpush1.msra.mxu0 %v97
  %103 = vmatprep.subr.mxu0 0.0
  %104 = vmatpush1.msra.mxu0 0.0
  %105 = vmatprep.subr.mxu0 0.0
  %106 = vmatpush1.msra.mxu0 0.0
  %107 = vmatprep.subr.mxu0 0.0
  %108 = vmatpush1.msra.mxu0 0.0
  %109 = vmatprep.subr.mxu0 0.0
  %110 = vmatpush1.msra.mxu0 0.0
  %111 = vmatprep.subr.mxu0 0.0
  %112 = vmatpush1.msra.mxu0 0.0
  %113 = vmatprep.subr.mxu0 0.0
  %114 = vmatpush1.msra.mxu0 0.0
  %115 = vmatprep.subr.mxu0 0.0
  %116 = vmatpush1.msra.mxu0 0.0
  %117 = vmatprep.subr.mxu0 0.0
  %118 = vmatpush1.msra.mxu0 0.0
  %119 = vmatprep.subr.mxu0 0.0
  %120 = vmatpush1.msra.mxu0 0.0
  %121 = vmatprep.subr.mxu0 0.0
  %122 = vmatpush1.msra.mxu0 0.0
  %123 = vmatprep.subr.mxu0 0.0
  %124 = vmatpush1.msra.mxu0 0.0
  %125 = vmatprep.subr.mxu0 0.0
  %126 = vmatpush1.msra.mxu0 0.0
  %127 = vmatprep.subr.mxu0 0.0
  %128 = vmatpush1.msra.mxu0 0.0
  %129 = vmatprep.subr.mxu0 0.0
  %130 = vmatpush1.msra.mxu0 0.0
  %131 = vmatprep.subr.mxu0 0.0
  %132 = vmatpush1.msra.mxu0 0.0
  %133 = vmatprep.subr.mxu0 0.0
  %134 = vmatpush1.msra.mxu0 0.0
  %135 = vmatprep.subr.mxu0 0.0
  %136 = vmatpush1.msra.mxu0 0.0
  %137 = vmatprep.subr.mxu0 0.0
  %138 = vmatpush1.msra.mxu0 0.0
  %139 = vmatprep.subr.mxu0 0.0
  %140 = vmatpush1.msra.mxu0 0.0
  %141 = vmatprep.subr.mxu0 0.0
  %142 = vmatpush1.msra.mxu0 0.0
  %143 = vmatprep.subr.mxu0 0.0
  %144 = vmatpush1.msra.mxu0 0.0
  %145 = vmatprep.subr.mxu0 0.0
  %146 = vmatpush1.msra.mxu0 0.0
  %147 = vmatprep.subr.mxu0 0.0
  %148 = vmatpush1.msra.mxu0 0.0
  %149 = vmatprep.subr.mxu0 0.0
  %150 = vmatpush1.msra.mxu0 0.0
  %151 = vmatprep.subr.mxu0 0.0
  %152 = vmatpush1.msra.mxu0 0.0
  %153 = vmatprep.subr.mxu0 0.0
  %154 = vmatpush1.msra.mxu0 0.0
  %155 = vmatprep.subr.mxu0 0.0
  %156 = vmatpush1.msra.mxu0 0.0
  %157 = vmatprep.subr.mxu0 0.0
  %158 = vmatpush1.msra.mxu0 0.0
  %159 = vmatprep.subr.mxu0 0.0
  %160 = vmatpush1.msra.mxu0 0.0
  %161 = vmatprep.subr.mxu0 0.0
  %162 = vmatpush1.msra.mxu0 0.0
  %163 = vmatprep.subr.mxu0 0.0
  %164 = vmatpush1.msra.mxu0 0.0
  %165 = vmatprep.mubr.f32.mxu0 0.0
  %166 = vmatmul.mubr.f32.gmra.mrb[0].mxu0 %v94
  %v167 = vpop.f32.mrb[0].mxu0
  %v168 = vadd.f32 0.0, %v167
  %v169 = vpop.f32.mrb[0].mxu0
  %v170 = vadd.f32 0.0, %v169
  %171 = vdwg.mxu0
  %v173 = vcombine.high %v35, %v35
  %v175 = vsel %vm92, %v88, 0
  %v177 = vsel %vm96, %v35, 0
  %v179 = vsel %vm96, %v173, 0
  %181 = vmatprep.subr.mxu0 %v179
  %182 = vmatpush1.msra.mxu0 %v177
  %183 = vmatprep.subr.mxu0 0.0
  %184 = vmatpush1.msra.mxu0 0.0
  %185 = vmatprep.subr.mxu0 0.0
  %186 = vmatpush1.msra.mxu0 0.0
  %187 = vmatprep.subr.mxu0 0.0
  %188 = vmatpush1.msra.mxu0 0.0
  %189 = vmatprep.subr.mxu0 0.0
  %190 = vmatpush1.msra.mxu0 0.0
  %191 = vmatprep.subr.mxu0 0.0
  %192 = vmatpush1.msra.mxu0 0.0
  %193 = vmatprep.subr.mxu0 0.0
  %194 = vmatpush1.msra.mxu0 0.0
  %195 = vmatprep.subr.mxu0 0.0
  %196 = vmatpush1.msra.mxu0 0.0
  %197 = vmatprep.subr.mxu0 0.0
  %198 = vmatpush1.msra.mxu0 0.0
  %199 = vmatprep.subr.mxu0 0.0
  %200 = vmatpush1.msra.mxu0 0.0
  %201 = vmatprep.subr.mxu0 0.0
  %202 = vmatpush1.msra.mxu0 0.0
  %203 = vmatprep.subr.mxu0 0.0
  %204 = vmatpush1.msra.mxu0 0.0
  %205 = vmatprep.subr.mxu0 0.0
  %206 = vmatpush1.msra.mxu0 0.0
  %207 = vmatprep.subr.mxu0 0.0
  %208 = vmatpush1.msra.mxu0 0.0
  %209 = vmatprep.subr.mxu0 0.0
  %210 = vmatpush1.msra.mxu0 0.0
  %211 = vmatprep.subr.mxu0 0.0
  %212 = vmatpush1.msra.mxu0 0.0
  %213 = vmatprep.subr.mxu0 0.0
  %214 = vmatpush1.msra.mxu0 0.0
  %215 = vmatprep.subr.mxu0 0.0
  %216 = vmatpush1.msra.mxu0 0.0
  %217 = vmatprep.subr.mxu0 0.0
  %218 = vmatpush1.msra.mxu0 0.0
  %219 = vmatprep.subr.mxu0 0.0
  %220 = vmatpush1.msra.mxu0 0.0
  %221 = vmatprep.subr.mxu0 0.0
  %222 = vmatpush1.msra.mxu0 0.0
  %223 = vmatprep.subr.mxu0 0.0
  %224 = vmatpush1.msra.mxu0 0.0
  %225 = vmatprep.subr.mxu0 0.0
  %226 = vmatpush1.msra.mxu0 0.0
  %227 = vmatprep.subr.mxu0 0.0
  %228 = vmatpush1.msra.mxu0 0.0
  %229 = vmatprep.subr.mxu0 0.0
  %230 = vmatpush1.msra.mxu0 0.0
  %231 = vmatprep.subr.mxu0 0.0
  %232 = vmatpush1.msra.mxu0 0.0
  %233 = vmatprep.subr.mxu0 0.0
  %234 = vmatpush1.msra.mxu0 0.0
  %235 = vmatprep.subr.mxu0 0.0
  %236 = vmatpush1.msra.mxu0 0.0
  %237 = vmatprep.subr.mxu0 0.0
  %238 = vmatpush1.msra.mxu0 0.0
  %239 = vmatprep.subr.mxu0 0.0
  %240 = vmatpush1.msra.mxu0 0.0
  %241 = vmatprep.subr.mxu0 0.0
  %242 = vmatpush1.msra.mxu0 0.0
  %243 = vmatprep.subr.mxu0 0.0
  %244 = vmatpush1.msra.mxu0 0.0
  %245 = vmatprep.mubr.f32.mxu0 0.0
  %246 = vmatmul.mubr.f32.gmra.mrb[0].mxu0 %v175
  %v247 = vpop.f32.mrb[0].mxu0
  %v248 = vadd.f32 %v168, %v247
  %v249 = vpop.f32.mrb[0].mxu0
  %v250 = vadd.f32 %v170, %v249
  %251 = vdwg.mxu0
  %v252 = vmax.f32 %v248, 0.0
  %v253 = vmax.f32 %v250, 0.0
  %254 = vmatprep.subr.mxu0 0.0
  %255 = vmatpush1.msra.mxu0 %v37
  %256 = vmatprep.subr.mxu0 0.0
  %257 = vmatpush1.msra.mxu0 %v38
  %258 = vmatprep.subr.mxu0 0.0
  %259 = vmatpush1.msra.mxu0 %v39
  %260 = vmatprep.subr.mxu0 0.0
  %261 = vmatpush1.msra.mxu0 %v40
  %262 = vmatprep.subr.mxu0 0.0
  %263 = vmatpush1.msra.mxu0 %v41
  %264 = vmatprep.subr.mxu0 0.0
  %265 = vmatpush1.msra.mxu0 %v42
  %266 = vmatprep.subr.mxu0 0.0
  %267 = vmatpush1.msra.mxu0 %v43
  %268 = vmatprep.subr.mxu0 0.0
  %269 = vmatpush1.msra.mxu0 %v44
  %270 = vmatprep.subr.mxu0 0.0
  %271 = vmatpush1.msra.mxu0 %v45
  %272 = vmatprep.subr.mxu0 0.0
  %273 = vmatpush1.msra.mxu0 %v46
  %274 = vmatprep.subr.mxu0 0.0
  %275 = vmatpush1.msra.mxu0 %v47
  %276 = vmatprep.subr.mxu0 0.0
  %277 = vmatpush1.msra.mxu0 %v48
  %278 = vmatprep.subr.mxu0 0.0
  %279 = vmatpush1.msra.mxu0 %v49
  %280 = vmatprep.subr.mxu0 0.0
  %281 = vmatpush1.msra.mxu0 %v50
  %282 = vmatprep.subr.mxu0 0.0
  %283 = vmatpush1.msra.mxu0 %v51
  %284 = vmatprep.subr.mxu0 0.0
  %285 = vmatpush1.msra.mxu0 %v52
  %286 = vmatprep.subr.mxu0 0.0
  %287 = vmatpush1.msra.mxu0 0.0
  %288 = vmatprep.subr.mxu0 0.0
  %289 = vmatpush1.msra.mxu0 0.0
  %290 = vmatprep.subr.mxu0 0.0
  %291 = vmatpush1.msra.mxu0 0.0
  %292 = vmatprep.subr.mxu0 0.0
  %293 = vmatpush1.msra.mxu0 0.0
  %294 = vmatprep.subr.mxu0 0.0
  %295 = vmatpush1.msra.mxu0 0.0
  %296 = vmatprep.subr.mxu0 0.0
  %297 = vmatpush1.msra.mxu0 0.0
  %298 = vmatprep.subr.mxu0 0.0
  %299 = vmatpush1.msra.mxu0 0.0
  %300 = vmatprep.subr.mxu0 0.0
  %301 = vmatpush1.msra.mxu0 0.0
  %302 = vmatprep.subr.mxu0 0.0
  %303 = vmatpush1.msra.mxu0 0.0
  %304 = vmatprep.subr.mxu0 0.0
  %305 = vmatpush1.msra.mxu0 0.0
  %306 = vmatprep.subr.mxu0 0.0
  %307 = vmatpush1.msra.mxu0 0.0
  %308 = vmatprep.subr.mxu0 0.0
  %309 = vmatpush1.msra.mxu0 0.0
  %310 = vmatprep.subr.mxu0 0.0
  %311 = vmatpush1.msra.mxu0 0.0
  %312 = vmatprep.subr.mxu0 0.0
  %313 = vmatpush1.msra.mxu0 0.0
  %314 = vmatprep.subr.mxu0 0.0
  %315 = vmatpush1.msra.mxu0 0.0
  %316 = vmatprep.subr.mxu0 0.0
  %317 = vmatpush1.msra.mxu0 0.0
  %318 = vmatprep.mubr.f32.mxu0 0.0
  %319 = vmatmul.mubr.f32.gmra.mrb[0].mxu0 %v253
  %v320 = vpop.f32.mrb[0].mxu0
  %v321 = vadd.f32 0.0, %v320
  %v322 = vpop.f32.mrb[0].mxu0
  %323 = vdwg.mxu0
  %v324 = vsel %vm92, %v321, -inf
  %325 = vmax.xlane.f32.xlu0 %v324
  %v326 = vpop.xlane.xlu0 %325
  %v327 = vsub.f32 %v321, %v326
  %v328 = vmul.f32 %v327, 1.442695
  %v329 = vpow.pop %v328
  %v330 = vsel %vm92, %v329, 0.0
  %331 = vadd.xlane.f32.xlu0 %v330
  %v332 = vpop.xlane.xlu0 %331
  %v333 = vrcp.pop %v332
  %v334 = vmul.f32 %v329, %v333
  %v336 = vlaneseq
  %v337 = vshrl.u32 %v336, 7
  %v338 = vsub.s32 0, %v337
  %v339 = vrot.slane %v69, %v338
  %341 = vmatprep.subr.mxu0 0.0
  %342 = vmatpush1.msra.mxu0 %v53
  %343 = vmatprep.subr.mxu0 0.0
  %344 = vmatpush1.msra.mxu0 %v54
  %345 = vmatprep.subr.mxu0 0.0
  %346 = vmatpush1.msra.mxu0 %v55
  %347 = vmatprep.subr.mxu0 0.0
  %348 = vmatpush1.msra.mxu0 %v56
  %349 = vmatprep.subr.mxu0 0.0
  %350 = vmatpush1.msra.mxu0 %v57
  %351 = vmatprep.subr.mxu0 0.0
  %352 = vmatpush1.msra.mxu0 %v58
  %353 = vmatprep.subr.mxu0 0.0
  %354 = vmatpush1.msra.mxu0 %v59
  %355 = vmatprep.subr.mxu0 0.0
  %356 = vmatpush1.msra.mxu0 %v60
  %357 = vmatprep.subr.mxu0 0.0
  %358 = vmatpush1.msra.mxu0 %v61
  %359 = vmatprep.subr.mxu0 0.0
  %360 = vmatpush1.msra.mxu0 %v62
  %361 = vmatprep.subr.mxu0 0.0
  %362 = vmatpush1.msra.mxu0 %v63
  %363 = vmatprep.subr.mxu0 0.0
  %364 = vmatpush1.msra.mxu0 %v64
  %365 = vmatprep.subr.mxu0 0.0
  %366 = vmatpush1.msra.mxu0 %v65
  %367 = vmatprep.subr.mxu0 0.0
  %368 = vmatpush1.msra.mxu0 %v66
  %369 = vmatprep.subr.mxu0 0.0
  %370 = vmatpush1.msra.mxu0 %v67
  %371 = vmatprep.subr.mxu0 0.0
  %372 = vmatpush1.msra.mxu0 %v68
  %373 = vmatprep.subr.mxu0 0.0
  %374 = vmatpush1.msra.mxu0 0.0
  %375 = vmatprep.subr.mxu0 0.0
  %376 = vmatpush1.msra.mxu0 0.0
  %377 = vmatprep.subr.mxu0 0.0
  %378 = vmatpush1.msra.mxu0 0.0
  %379 = vmatprep.subr.mxu0 0.0
  %380 = vmatpush1.msra.mxu0 0.0
  %381 = vmatprep.subr.mxu0 0.0
  %382 = vmatpush1.msra.mxu0 0.0
  %383 = vmatprep.subr.mxu0 0.0
  %384 = vmatpush1.msra.mxu0 0.0
  %385 = vmatprep.subr.mxu0 0.0
  %386 = vmatpush1.msra.mxu0 0.0
  %387 = vmatprep.subr.mxu0 0.0
  %388 = vmatpush1.msra.mxu0 0.0
  %389 = vmatprep.subr.mxu0 0.0
  %390 = vmatpush1.msra.mxu0 0.0
  %391 = vmatprep.subr.mxu0 0.0
  %392 = vmatpush1.msra.mxu0 0.0
  %393 = vmatprep.subr.mxu0 0.0
  %394 = vmatpush1.msra.mxu0 0.0
  %395 = vmatprep.subr.mxu0 0.0
  %396 = vmatpush1.msra.mxu0 0.0
  %397 = vmatprep.subr.mxu0 0.0
  %398 = vmatpush1.msra.mxu0 0.0
  %399 = vmatprep.subr.mxu0 0.0
  %400 = vmatpush1.msra.mxu0 0.0
  %401 = vmatprep.subr.mxu0 0.0
  %402 = vmatpush1.msra.mxu0 0.0
  %403 = vmatprep.subr.mxu0 0.0
  %404 = vmatpush1.msra.mxu0 0.0
  %405 = vmatprep.mubr.f32.mxu0 0.0
  %406 = vmatmul.mubr.f32.gmra.mrb[0].mxu0 %v252
  %v407 = vpop.f32.mrb[0].mxu0
  %v408 = vadd.f32 %v339, %v407
  %v409 = vpop.f32.mrb[0].mxu0
  %410 = vdwg.mxu0
  %v411 = vmax.f32 %v408, 0.0
  %v413 = vsel %vm92, %v334, 0
  %v416 = vsel %vm96, %v87, 0
  %418 = vmatprep.subr.mxu0 0.0
  %419 = vmatpush1.msra.mxu0 %v416
  %420 = vmatprep.subr.mxu0 0.0
  %421 = vmatpush1.msra.mxu0 0.0
  %422 = vmatprep.subr.mxu0 0.0
  %423 = vmatpush1.msra.mxu0 0.0
  %424 = vmatprep.subr.mxu0 0.0
  %425 = vmatpush1.msra.mxu0 0.0
  %426 = vmatprep.subr.mxu0 0.0
  %427 = vmatpush1.msra.mxu0 0.0
  %428 = vmatprep.subr.mxu0 0.0
  %429 = vmatpush1.msra.mxu0 0.0
  %430 = vmatprep.subr.mxu0 0.0
  %431 = vmatpush1.msra.mxu0 0.0
  %432 = vmatprep.subr.mxu0 0.0
  %433 = vmatpush1.msra.mxu0 0.0
  %434 = vmatprep.subr.mxu0 0.0
  %435 = vmatpush1.msra.mxu0 0.0
  %436 = vmatprep.subr.mxu0 0.0
  %437 = vmatpush1.msra.mxu0 0.0
  %438 = vmatprep.subr.mxu0 0.0
  %439 = vmatpush1.msra.mxu0 0.0
  %440 = vmatprep.subr.mxu0 0.0
  %441 = vmatpush1.msra.mxu0 0.0
  %442 = vmatprep.subr.mxu0 0.0
  %443 = vmatpush1.msra.mxu0 0.0
  %444 = vmatprep.subr.mxu0 0.0
  %445 = vmatpush1.msra.mxu0 0.0
  %446 = vmatprep.subr.mxu0 0.0
  %447 = vmatpush1.msra.mxu0 0.0
  %448 = vmatprep.subr.mxu0 0.0
  %449 = vmatpush1.msra.mxu0 0.0
  %450 = vmatprep.subr.mxu0 0.0
  %451 = vmatpush1.msra.mxu0 0.0
  %452 = vmatprep.subr.mxu0 0.0
  %453 = vmatpush1.msra.mxu0 0.0
  %454 = vmatprep.subr.mxu0 0.0
  %455 = vmatpush1.msra.mxu0 0.0
  %456 = vmatprep.subr.mxu0 0.0
  %457 = vmatpush1.msra.mxu0 0.0
  %458 = vmatprep.subr.mxu0 0.0
  %459 = vmatpush1.msra.mxu0 0.0
  %460 = vmatprep.subr.mxu0 0.0
  %461 = vmatpush1.msra.mxu0 0.0
  %462 = vmatprep.subr.mxu0 0.0
  %463 = vmatpush1.msra.mxu0 0.0
  %464 = vmatprep.subr.mxu0 0.0
  %465 = vmatpush1.msra.mxu0 0.0
  %466 = vmatprep.subr.mxu0 0.0
  %467 = vmatpush1.msra.mxu0 0.0
  %468 = vmatprep.subr.mxu0 0.0
  %469 = vmatpush1.msra.mxu0 0.0
  %470 = vmatprep.subr.mxu0 0.0
  %471 = vmatpush1.msra.mxu0 0.0
  %472 = vmatprep.subr.mxu0 0.0
  %473 = vmatpush1.msra.mxu0 0.0
  %474 = vmatprep.subr.mxu0 0.0
  %475 = vmatpush1.msra.mxu0 0.0
  %476 = vmatprep.subr.mxu0 0.0
  %477 = vmatpush1.msra.mxu0 0.0
  %478 = vmatprep.subr.mxu0 0.0
  %479 = vmatpush1.msra.mxu0 0.0
  %480 = vmatprep.subr.mxu0 0.0
  %481 = vmatpush1.msra.mxu0 0.0
  %482 = vmatprep.mubr.f32.mxu0 0.0
  %483 = vmatmul.mubr.f32.gmra.mrb[0].mxu0 %v413
  %v484 = vpop.f32.mrb[0].mxu0
  %v485 = vadd.f32 0.0, %v484
  %v486 = vpop.f32.mrb[0].mxu0
  %487 = vdwg.mxu0
  %v488 = vmul.f32 %v411, %v485
  %v490 = vsel %vm96, %v86, 0
  %492 = vmatprep.subr.mxu0 0.0
  %493 = vmatpush1.msra.mxu0 %v490
  %494 = vmatprep.subr.mxu0 0.0
  %495 = vmatpush1.msra.mxu0 0.0
  %496 = vmatprep.subr.mxu0 0.0
  %497 = vmatpush1.msra.mxu0 0.0
  %498 = vmatprep.subr.mxu0 0.0
  %499 = vmatpush1.msra.mxu0 0.0
  %500 = vmatprep.subr.mxu0 0.0
  %501 = vmatpush1.msra.mxu0 0.0
  %502 = vmatprep.subr.mxu0 0.0
  %503 = vmatpush1.msra.mxu0 0.0
  %504 = vmatprep.subr.mxu0 0.0
  %505 = vmatpush1.msra.mxu0 0.0
  %506 = vmatprep.subr.mxu0 0.0
  %507 = vmatpush1.msra.mxu0 0.0
  %508 = vmatprep.subr.mxu0 0.0
  %509 = vmatpush1.msra.mxu0 0.0
  %510 = vmatprep.subr.mxu0 0.0
  %511 = vmatpush1.msra.mxu0 0.0
  %512 = vmatprep.subr.mxu0 0.0
  %513 = vmatpush1.msra.mxu0 0.0
  %514 = vmatprep.subr.mxu0 0.0
  %515 = vmatpush1.msra.mxu0 0.0
  %516 = vmatprep.subr.mxu0 0.0
  %517 = vmatpush1.msra.mxu0 0.0
  %518 = vmatprep.subr.mxu0 0.0
  %519 = vmatpush1.msra.mxu0 0.0
  %520 = vmatprep.subr.mxu0 0.0
  %521 = vmatpush1.msra.mxu0 0.0
  %522 = vmatprep.subr.mxu0 0.0
  %523 = vmatpush1.msra.mxu0 0.0
  %524 = vmatprep.subr.mxu0 0.0
  %525 = vmatpush1.msra.mxu0 0.0
  %526 = vmatprep.subr.mxu0 0.0
  %527 = vmatpush1.msra.mxu0 0.0
  %528 = vmatprep.subr.mxu0 0.0
  %529 = vmatpush1.msra.mxu0 0.0
  %530 = vmatprep.subr.mxu0 0.0
  %531 = vmatpush1.msra.mxu0 0.0
  %532 = vmatprep.subr.mxu0 0.0
  %533 = vmatpush1.msra.mxu0 0.0
  %534 = vmatprep.subr.mxu0 0.0
  %535 = vmatpush1.msra.mxu0 0.0
  %536 = vmatprep.subr.mxu0 0.0
  %537 = vmatpush1.msra.mxu0 0.0
  %538 = vmatprep.subr.mxu0 0.0
  %539 = vmatpush1.msra.mxu0 0.0
  %540 = vmatprep.subr.mxu0 0.0
  %541 = vmatpush1.msra.mxu0 0.0
  %542 = vmatprep.subr.mxu0 0.0
  %543 = vmatpush1.msra.mxu0 0.0
  %544 = vmatprep.subr.mxu0 0.0
  %545 = vmatpush1.msra.mxu0 0.0
  %546 = vmatprep.subr.mxu0 0.0
  %547 = vmatpush1.msra.mxu0 0.0
  %548 = vmatprep.subr.mxu0 0.0
  %549 = vmatpush1.msra.mxu0 0.0
  %550 = vmatprep.subr.mxu0 0.0
  %551 = vmatpush1.msra.mxu0 0.0
  %552 = vmatprep.subr.mxu0 0.0
  %553 = vmatpush1.msra.mxu0 0.0
  %554 = vmatprep.subr.mxu0 0.0
  %555 = vmatpush1.msra.mxu0 0.0
  %556 = vmatprep.mubr.f32.mxu0 0.0
  %557 = vmatmul.mubr.f32.gmra.mrb[0].mxu0 %v413
  %v558 = vpop.f32.mrb[0].mxu0
  %v559 = vadd.f32 0.0, %v558
  %v560 = vpop.f32.mrb[0].mxu0
  %561 = vdwg.mxu0
  %562 = vmatprep.subr.mxu0 0.0
  %563 = vmatpush1.msra.mxu0 %v70
  %564 = vmatprep.subr.mxu0 0.0
  %565 = vmatpush1.msra.mxu0 %v71
  %566 = vmatprep.subr.mxu0 0.0
  %567 = vmatpush1.msra.mxu0 %v72
  %568 = vmatprep.subr.mxu0 0.0
  %569 = vmatpush1.msra.mxu0 %v73
  %570 = vmatprep.subr.mxu0 0.0
  %571 = vmatpush1.msra.mxu0 %v74
  %572 = vmatprep.subr.mxu0 0.0
  %573 = vmatpush1.msra.mxu0 %v75
  %574 = vmatprep.subr.mxu0 0.0
  %575 = vmatpush1.msra.mxu0 %v76
  %576 = vmatprep.subr.mxu0 0.0
  %577 = vmatpush1.msra.mxu0 %v77
  %578 = vmatprep.subr.mxu0 0.0
  %579 = vmatpush1.msra.mxu0 %v78
  %580 = vmatprep.subr.mxu0 0.0
  %581 = vmatpush1.msra.mxu0 %v79
  %582 = vmatprep.subr.mxu0 0.0
  %583 = vmatpush1.msra.mxu0 %v80
  %584 = vmatprep.subr.mxu0 0.0
  %585 = vmatpush1.msra.mxu0 %v81
  %586 = vmatprep.subr.mxu0 0.0
  %587 = vmatpush1.msra.mxu0 %v82
  %588 = vmatprep.subr.mxu0 0.0
  %589 = vmatpush1.msra.mxu0 %v83
  %590 = vmatprep.subr.mxu0 0.0
  %591 = vmatpush1.msra.mxu0 %v84
  %592 = vmatprep.subr.mxu0 0.0
  %593 = vmatpush1.msra.mxu0 %v85
  %594 = vmatprep.subr.mxu0 0.0
  %595 = vmatpush1.msra.mxu0 0.0
  %596 = vmatprep.subr.mxu0 0.0
  %597 = vmatpush1.msra.mxu0 0.0
  %598 = vmatprep.subr.mxu0 0.0
  %599 = vmatpush1.msra.mxu0 0.0
  %600 = vmatprep.subr.mxu0 0.0
  %601 = vmatpush1.msra.mxu0 0.0
  %602 = vmatprep.subr.mxu0 0.0
  %603 = vmatpush1.msra.mxu0 0.0
  %604 = vmatprep.subr.mxu0 0.0
  %605 = vmatpush1.msra.mxu0 0.0
  %606 = vmatprep.subr.mxu0 0.0
  %607 = vmatpush1.msra.mxu0 0.0
  %608 = vmatprep.subr.mxu0 0.0
  %609 = vmatpush1.msra.mxu0 0.0
  %610 = vmatprep.subr.mxu0 0.0
  %611 = vmatpush1.msra.mxu0 0.0
  %612 = vmatprep.subr.mxu0 0.0
  %613 = vmatpush1.msra.mxu0 0.0
  %614 = vmatprep.subr.mxu0 0.0
  %615 = vmatpush1.msra.mxu0 0.0
  %616 = vmatprep.subr.mxu0 0.0
  %617 = vmatpush1.msra.mxu0 0.0
  %618 = vmatprep.subr.mxu0 0.0
  %619 = vmatpush1.msra.mxu0 0.0
  %620 = vmatprep.subr.mxu0 0.0
  %621 = vmatpush1.msra.mxu0 0.0
  %622 = vmatprep.subr.mxu0 0.0
  %623 = vmatpush1.msra.mxu0 0.0
  %624 = vmatprep.subr.mxu0 0.0
  %625 = vmatpush1.msra.mxu0 0.0
  %626 = vmatprep.mubr.f32.mxu0 0.0
  %627 = vmatmul.mubr.f32.gmra.mrb[0].mxu0 %v488
  %v628 = vpop.f32.mrb[0].mxu0
  %v629 = vadd.f32 %v559, %v628
  %v630 = vpop.f32.mrb[0].mxu0
  %631 = vdwg.mxu0
  %632 = vst.msk [vmem:[%s10] sm:$0xff] %vm92, %v629
  // Predicated region
  $region42: #{tpu_custom_call.1} parent=0 // pred_check
    _
  $region43: #{tpu_custom_call.1} parent=0 // pred_check_branch
    %634 = sbr.rel (0) target = $region45
  $region44: #{tpu_custom_call.1} parent=0 // pred_region
    _
  $region45: #{tpu_custom_call.1} parent=0 // pred_fallthru
    _
  // Predicated region
  $region46: #{tpu_custom_call.1} parent=0 // pred_check
    _
  $region47: #{tpu_custom_call.1} parent=0 // pred_check_branch
    %636 = sbr.rel (0) target = $region49
  $region48: #{tpu_custom_call.1} parent=0 // pred_region
    _
  $region49: #{tpu_custom_call.1} parent=0 // pred_fallthru
    _

</llo_original>
